<compile_context>
chip_gen: v6e
topology: v6e:2x2x1
jax: 0.10.0
libtpu: 0.0.40
codegen_flags: <defaults>
</compile_context>

<pallas_src>
import jax
import jax.numpy as jnp
from jax.experimental import pallas as pl
from jax.experimental.pallas import tpu as pltpu


LEAKY_SLOPE = 0.01          # PyTorch F.leaky_relu default negative_slope
MASK_VAL = -1e30            # large-negative mask; score path stays in float32
LANE = 128                  # TPU lane width; output feature dim padded to this


def gat_kernel(h_dst_ref, h_src_ref, w_ref, a_src_ref, a_dst_ref, adj_ref,
               out_ref, s_dst_scr, m_scr, l_scr, acc_scr):
    """One (dst_tile, src_tile) step of the GAT forward with online softmax."""
    j = pl.program_id(1)

    # ---- per-dst-tile init (runs once, at the first src tile): running
    #      max / denom / accumulator and the destination-side score s_dst.
    @pl.when(j == 0)
    def _init():
        z_dst = jnp.dot(h_dst_ref[...], w_ref[...],
                        preferred_element_type=jnp.float32)            # [t_dst, D]
        # s_dst[i] = z_dst[i] . a_dst  (VPU mul + lane reduce, no degenerate matmul)
        s_dst_scr[...] = jnp.sum(z_dst * a_dst_ref[...], axis=-1, keepdims=True)
        m_scr[...] = jnp.full_like(m_scr, MASK_VAL)
        l_scr[...] = jnp.zeros_like(l_scr)
        acc_scr[...] = jnp.zeros_like(acc_scr)

    # ---- source-side projection for this src tile
    z_src = jnp.dot(h_src_ref[...], w_ref[...],
                    preferred_element_type=jnp.float32)                 # [t_src, D]

    # s_src produced directly as a lane-dense [1, t_src] row: contract
    # a_src [1, D] against z_src [t_src, D] over D (A @ B^T form) -> no
    # [t_src, 1] -> [1, t_src] transpose needed.
    s_src = jax.lax.dot_general(
        a_src_ref[...], z_src,
        dimension_numbers=(((1,), (1,)), ((), ())),
        preferred_element_type=jnp.float32)                             # [1, t_src]

    # e[i, j] = leaky_relu(s_dst[i] + s_src[j]), masked by adjacency
    e = s_dst_scr[...] + s_src                                          # [t_dst, t_src]
    e = jnp.where(e > 0, e, LEAKY_SLOPE * e)
    adj = adj_ref[...]
    e = jnp.where(adj > 0, e, MASK_VAL)

    # ---- flash-style online masked softmax + aggregation
    m_prev = m_scr[...]
    m_new = jnp.maximum(m_prev, jnp.max(e, axis=-1, keepdims=True))     # [t_dst, 1]
    corr = jnp.exp(m_prev - m_new)
    p = jnp.exp(e - m_new) * adj                                        # 0/1 mask via mul
    l_scr[...] = corr * l_scr[...] + jnp.sum(p, axis=-1, keepdims=True)
    acc_scr[...] = corr * acc_scr[...] + jnp.dot(
        p, z_src, preferred_element_type=jnp.float32)
    m_scr[...] = m_new

    # ---- finalize: single normalization via EUP reciprocal, lane-dense store
    @pl.when(j == pl.num_programs(1) - 1)
    def _finalize():
        # guard against isolated nodes (denominator == 0)
        inv_l = pl.reciprocal(jnp.maximum(l_scr[...], 1e-20), approx=True)
        out_ref[...] = (acc_scr[...] * inv_l).astype(out_ref.dtype)


def gat_forward(h, w_t, a_src, a_dst, adj, *, tile=128):
    """GAT forward.
      h     : [N, in_dim]    node features
      w_t   : [in_dim, out_dim]  = fc.weight.T
      a_src : [out_dim]      first half of attn_fc.weight  (applied to src z)
      a_dst : [out_dim]      second half of attn_fc.weight (applied to dst z)
      adj   : [N, N]         adj[i, j] = 1.0 iff edge j (src) -> i (dst)
    """
    N, in_dim = h.shape
    out_dim = w_t.shape[1]

    # dst (parallel) x src (arbitrary) tiling; fall back to a single full block
    # when N is not a multiple of the tile size.
    t_dst = tile if N % tile == 0 else N
    t_src = tile if N % tile == 0 else N
    grid = (N // t_dst, N // t_src)

    # Lane-dense output: pad the output-feature dim to a multiple of 128 so the
    # final stores and the alpha@z / h@W matmuls use full 128-lane vregs.
    d_pad = max(LANE, ((out_dim + LANE - 1) // LANE) * LANE)
    w_p = jnp.zeros((in_dim, d_pad), jnp.float32).at[:, :out_dim].set(w_t)
    a_src_p = jnp.zeros((1, d_pad), jnp.float32).at[0, :out_dim].set(a_src)
    a_dst_p = jnp.zeros((1, d_pad), jnp.float32).at[0, :out_dim].set(a_dst)

    out_padded = pl.pallas_call(
        gat_kernel,
        out_shape=jax.ShapeDtypeStruct((N, d_pad), jnp.float32),
        grid_spec=pltpu.PrefetchScalarGridSpec(
            num_scalar_prefetch=0,
            grid=grid,
            in_specs=[
                pl.BlockSpec((t_dst, in_dim), lambda i, j: (i, 0)),   # h (dst rows)
                pl.BlockSpec((t_src, in_dim), lambda i, j: (j, 0)),   # h (src rows)
                pl.BlockSpec((in_dim, d_pad), lambda i, j: (0, 0)),   # W^T (resident)
                pl.BlockSpec((1, d_pad), lambda i, j: (0, 0)),        # a_src row
                pl.BlockSpec((1, d_pad), lambda i, j: (0, 0)),        # a_dst row
                pl.BlockSpec((t_dst, t_src), lambda i, j: (i, j)),    # adjacency tile
            ],
            out_specs=pl.BlockSpec((t_dst, d_pad), lambda i, j: (i, 0)),
            scratch_shapes=[
                pltpu.VMEM((t_dst, 1), jnp.float32),      # s_dst cache
                pltpu.VMEM((t_dst, 1), jnp.float32),      # running max
                pltpu.VMEM((t_dst, 1), jnp.float32),      # running denom
                pltpu.VMEM((t_dst, d_pad), jnp.float32),  # output accumulator
            ],
        ),
        compiler_params=pltpu.CompilerParams(
            dimension_semantics=("parallel", "arbitrary")),
    )(h, h, w_p, a_src_p, a_dst_p, adj)
    return out_padded[:, :out_dim]


def gat_reference(h, w_t, a_src, a_dst, adj):
    """Pure-JAX dense reference with identical semantics."""
    z = h @ w_t
    s_src = z @ a_src                                   # [N]
    s_dst = z @ a_dst                                   # [N]
    e = s_dst[:, None] + s_src[None, :]
    e = jnp.where(e > 0, e, LEAKY_SLOPE * e)
    e = jnp.where(adj > 0, e, MASK_VAL)
    p = jnp.exp(e - jnp.max(e, axis=-1, keepdims=True))
    p = p * adj
    alpha = p / jnp.sum(p, axis=-1, keepdims=True)
    return alpha @ z


if __name__ == "__main__":
    key = jax.random.PRNGKey(0)

    # small single-block case and a gridded (2x2 tiles) case
    for N, in_dim, out_dim in [(16, 16, 32), (256, 16, 32)]:
        k_h, k_fc, k_attn, key = jax.random.split(key, 4)

        # node features [N, in_dim]
        h = jax.random.normal(k_h, (N, in_dim), dtype=jnp.float32)

        # fc.weight: [out_dim, in_dim] -> pass transposed [in_dim, out_dim]
        fc_weight = jax.random.normal(k_fc, (out_dim, in_dim), dtype=jnp.float32) * 0.1
        w_t = fc_weight.T

        # attn_fc.weight: [1, 2*out_dim] -> src / dst halves as 1-D vectors
        attn_weight = jax.random.normal(k_attn, (1, 2 * out_dim), dtype=jnp.float32) * 0.1
        a_src = attn_weight[0, :out_dim]
        a_dst = attn_weight[0, out_dim:]

        # deterministic graph: self-loops + ring (i-1 -> i) + skip (i-2 -> i);
        # every node has >= 1 incoming edge (DGL softmax over non-empty mailbox).
        idx = jnp.arange(N)
        adj = jnp.zeros((N, N), dtype=jnp.float32)
        adj = adj.at[idx, idx].set(1.0)
        adj = adj.at[idx, (idx - 1) % N].set(1.0)
        adj = adj.at[idx, (idx - 2) % N].set(1.0)

        out = jax.block_until_ready(gat_forward(h, w_t, a_src, a_dst, adj))
        ref = gat_reference(h, w_t, a_src, a_dst, adj)

        assert out.shape == (N, out_dim)
        assert jnp.all(jnp.isfinite(out))
        assert jnp.allclose(out, ref, rtol=1e-2, atol=1e-2), (
            N, float(jnp.max(jnp.abs(out - ref))))

    print("KERNEL_OK")
</pallas_src>

<mosaic_0001>
module attributes {stable_mosaic.version = 11 : i64} {
  func.func @gat_kernel(%arg0: i32, %arg1: i32, %arg2: memref<16x16xf32, #tpu.memory_space<vmem>>, %arg3: memref<16x16xf32, #tpu.memory_space<vmem>>, %arg4: memref<16x128xf32, #tpu.memory_space<vmem>>, %arg5: memref<1x128xf32, #tpu.memory_space<vmem>>, %arg6: memref<1x128xf32, #tpu.memory_space<vmem>>, %arg7: memref<16x16xf32, #tpu.memory_space<vmem>>, %arg8: memref<16x128xf32, #tpu.memory_space<vmem>>, %arg9: memref<16x1xf32, #tpu.memory_space<vmem>>, %arg10: memref<16x1xf32, #tpu.memory_space<vmem>>, %arg11: memref<16x1xf32, #tpu.memory_space<vmem>>, %arg12: memref<16x128xf32, #tpu.memory_space<vmem>>) attributes {dimension_semantics = [#tpu.dimension_semantics<parallel>, #tpu.dimension_semantics<arbitrary>], iteration_bounds = array<i64: 1, 1>, scalar_prefetch = 0 : i64, scratch_operands = 4 : i64, tpu.core_type = #tpu.core_type<tc>, window_params = [{transform_indices = @transform_0, window_bounds = array<i64: 16, 16>}, {transform_indices = @transform_1, window_bounds = array<i64: 16, 16>}, {pipeline_mode = #tpu.pipeline_mode<synchronous>, transform_indices = @transform_2, window_bounds = array<i64: 16, 128>}, {pipeline_mode = #tpu.pipeline_mode<synchronous>, transform_indices = @transform_3, window_bounds = array<i64: 1, 128>}, {pipeline_mode = #tpu.pipeline_mode<synchronous>, transform_indices = @transform_4, window_bounds = array<i64: 1, 128>}, {transform_indices = @transform_5, window_bounds = array<i64: 16, 16>}, {transform_indices = @transform_6, window_bounds = array<i64: 16, 128>}]} {
    %c0_i32 = arith.constant 0 : i32
    %0 = arith.cmpi eq, %arg1, %c0_i32 : i32
    %1 = arith.extui %0 : i1 to i32
    %c0_i32_0 = arith.constant 0 : i32
    %2 = arith.cmpi ne, %1, %c0_i32_0 : i32
    scf.if %2 {
      %c0_32 = arith.constant 0 : index
      %c0_33 = arith.constant 0 : index
      %48 = vector.load %arg2[%c0_32, %c0_33] : memref<16x16xf32, #tpu.memory_space<vmem>>, vector<16x16xf32>
      %c0_34 = arith.constant 0 : index
      %c0_35 = arith.constant 0 : index
      %49 = vector.load %arg4[%c0_34, %c0_35] : memref<16x128xf32, #tpu.memory_space<vmem>>, vector<16x128xf32>
      %cst_36 = arith.constant dense<0.000000e+00> : vector<16x128xf32>
      %50 = tpu.matmul %48, %49, %cst_36 {dimension_numbers = #tpu.dot_dimension_numbers<[1], [0], [0], [1], [0, 0, 1, 1], [], []>} : vector<16x16xf32>, vector<16x128xf32>, vector<16x128xf32> -> vector<16x128xf32>
      %c0_37 = arith.constant 0 : index
      %c0_38 = arith.constant 0 : index
      %51 = vector.load %arg6[%c0_37, %c0_38] : memref<1x128xf32, #tpu.memory_space<vmem>>, vector<1x128xf32>
      %52 = vector.broadcast %51 : vector<1x128xf32> to vector<16x128xf32>
      %53 = arith.mulf %50, %52 : vector<16x128xf32>
      %cst_39 = arith.constant dense<0.000000e+00> : vector<16xf32>
      %54 = vector.multi_reduction <add>, %53, %cst_39 [1] : vector<16x128xf32> to vector<16xf32>
      %55 = vector.shape_cast %54 : vector<16xf32> to vector<16x1xf32>
      %c0_40 = arith.constant 0 : index
      %c0_41 = arith.constant 0 : index
      %56 = vector.load %arg9[%c0_40, %c0_41] : memref<16x1xf32, #tpu.memory_space<vmem>>, vector<16x1xf32>
      tpu.vector_store %arg9[%c0_40, %c0_41], %55 {strides = array<i32>} : memref<16x1xf32, #tpu.memory_space<vmem>>, vector<16x1xf32>,
      %cst_42 = arith.constant -1.000000e+30 : f32
      %57 = vector.broadcast %cst_42 : f32 to vector<16x1xf32>
      %c0_43 = arith.constant 0 : index
      %c0_44 = arith.constant 0 : index
      %58 = vector.load %arg10[%c0_43, %c0_44] : memref<16x1xf32, #tpu.memory_space<vmem>>, vector<16x1xf32>
      tpu.vector_store %arg10[%c0_43, %c0_44], %57 {strides = array<i32>} : memref<16x1xf32, #tpu.memory_space<vmem>>, vector<16x1xf32>,
      %cst_45 = arith.constant 0.000000e+00 : f32
      %59 = vector.broadcast %cst_45 : f32 to vector<16x1xf32>
      %c0_46 = arith.constant 0 : index
      %c0_47 = arith.constant 0 : index
      %60 = vector.load %arg11[%c0_46, %c0_47] : memref<16x1xf32, #tpu.memory_space<vmem>>, vector<16x1xf32>
      tpu.vector_store %arg11[%c0_46, %c0_47], %59 {strides = array<i32>} : memref<16x1xf32, #tpu.memory_space<vmem>>, vector<16x1xf32>,
      %cst_48 = arith.constant 0.000000e+00 : f32
      %61 = vector.broadcast %cst_48 : f32 to vector<16x128xf32>
      %c0_49 = arith.constant 0 : index
      %c0_50 = arith.constant 0 : index
      %62 = vector.load %arg12[%c0_49, %c0_50] : memref<16x128xf32, #tpu.memory_space<vmem>>, vector<16x128xf32>
      tpu.vector_store %arg12[%c0_49, %c0_50], %61 {strides = array<i32>} : memref<16x128xf32, #tpu.memory_space<vmem>>, vector<16x128xf32>,
    } else {
    }
    %c0 = arith.constant 0 : index
    %c0_1 = arith.constant 0 : index
    %3 = vector.load %arg3[%c0, %c0_1] : memref<16x16xf32, #tpu.memory_space<vmem>>, vector<16x16xf32>
    %c0_2 = arith.constant 0 : index
    %c0_3 = arith.constant 0 : index
    %4 = vector.load %arg4[%c0_2, %c0_3] : memref<16x128xf32, #tpu.memory_space<vmem>>, vector<16x128xf32>
    %cst = arith.constant dense<0.000000e+00> : vector<16x128xf32>
    %5 = tpu.matmul %3, %4, %cst {dimension_numbers = #tpu.dot_dimension_numbers<[1], [0], [0], [1], [0, 0, 1, 1], [], []>} : vector<16x16xf32>, vector<16x128xf32>, vector<16x128xf32> -> vector<16x128xf32>
    %c0_4 = arith.constant 0 : index
    %c0_5 = arith.constant 0 : index
    %6 = vector.load %arg5[%c0_4, %c0_5] : memref<1x128xf32, #tpu.memory_space<vmem>>, vector<1x128xf32>
    %cst_6 = arith.constant dense<0.000000e+00> : vector<1x16xf32>
    %7 = tpu.matmul %6, %5, %cst_6 {dimension_numbers = #tpu.dot_dimension_numbers<[1], [1], [0], [0], [0, 0, 1, 0], [], []>} : vector<1x128xf32>, vector<16x128xf32>, vector<1x16xf32> -> vector<1x16xf32>
    %c0_7 = arith.constant 0 : index
    %c0_8 = arith.constant 0 : index
    %8 = vector.load %arg9[%c0_7, %c0_8] : memref<16x1xf32, #tpu.memory_space<vmem>>, vector<16x1xf32>
    %9 = vector.broadcast %8 : vector<16x1xf32> to vector<16x16xf32>
    %10 = vector.broadcast %7 : vector<1x16xf32> to vector<16x16xf32>
    %11 = arith.addf %9, %10 : vector<16x16xf32>
    %cst_9 = arith.constant 0.000000e+00 : f32
    %12 = vector.broadcast %cst_9 : f32 to vector<16x16xf32>
    %13 = arith.cmpf ogt, %11, %12 : vector<16x16xf32>
    %cst_10 = arith.constant 0.00999999977 : f32
    %14 = vector.broadcast %cst_10 : f32 to vector<16x16xf32>
    %15 = arith.mulf %14, %11 : vector<16x16xf32>
    %16 = arith.select %13, %11, %15 : vector<16x16xi1>, vector<16x16xf32>
    %c0_11 = arith.constant 0 : index
    %c0_12 = arith.constant 0 : index
    %17 = vector.load %arg7[%c0_11, %c0_12] : memref<16x16xf32, #tpu.memory_space<vmem>>, vector<16x16xf32>
    %cst_13 = arith.constant 0.000000e+00 : f32
    %18 = vector.broadcast %cst_13 : f32 to vector<16x16xf32>
    %19 = arith.cmpf ogt, %17, %18 : vector<16x16xf32>
    %cst_14 = arith.constant -1.000000e+30 : f32
    %20 = vector.broadcast %cst_14 : f32 to vector<16x16xf32>
    %21 = arith.select %19, %16, %20 : vector<16x16xi1>, vector<16x16xf32>
    %c0_15 = arith.constant 0 : index
    %c0_16 = arith.constant 0 : index
    %22 = vector.load %arg10[%c0_15, %c0_16] : memref<16x1xf32, #tpu.memory_space<vmem>>, vector<16x1xf32>
    %cst_17 = arith.constant dense<0xFF800000> : vector<16xf32>
    %23 = vector.multi_reduction <maximumf>, %21, %cst_17 [1] : vector<16x16xf32> to vector<16xf32>
    %24 = vector.shape_cast %23 : vector<16xf32> to vector<16x1xf32>
    %25 = arith.maximumf %22, %24 : vector<16x1xf32>
    %26 = arith.subf %22, %25 : vector<16x1xf32>
    %27 = math.exp %26 : vector<16x1xf32>
    %28 = vector.broadcast %25 : vector<16x1xf32> to vector<16x16xf32>
    %29 = arith.subf %21, %28 : vector<16x16xf32>
    %30 = math.exp %29 : vector<16x16xf32>
    %31 = arith.mulf %30, %17 : vector<16x16xf32>
    %c0_18 = arith.constant 0 : index
    %c0_19 = arith.constant 0 : index
    %32 = vector.load %arg11[%c0_18, %c0_19] : memref<16x1xf32, #tpu.memory_space<vmem>>, vector<16x1xf32>
    %33 = arith.mulf %27, %32 : vector<16x1xf32>
    %cst_20 = arith.constant dense<0.000000e+00> : vector<16xf32>
    %34 = vector.multi_reduction <add>, %31, %cst_20 [1] : vector<16x16xf32> to vector<16xf32>
    %35 = vector.shape_cast %34 : vector<16xf32> to vector<16x1xf32>
    %36 = arith.addf %33, %35 : vector<16x1xf32>
    %c0_21 = arith.constant 0 : index
    %c0_22 = arith.constant 0 : index
    %37 = vector.load %arg11[%c0_21, %c0_22] : memref<16x1xf32, #tpu.memory_space<vmem>>, vector<16x1xf32>
    tpu.vector_store %arg11[%c0_21, %c0_22], %36 {strides = array<i32>} : memref<16x1xf32, #tpu.memory_space<vmem>>, vector<16x1xf32>,
    %c0_23 = arith.constant 0 : index
    %c0_24 = arith.constant 0 : index
    %38 = vector.load %arg12[%c0_23, %c0_24] : memref<16x128xf32, #tpu.memory_space<vmem>>, vector<16x128xf32>
    %39 = vector.broadcast %27 : vector<16x1xf32> to vector<16x128xf32>
    %40 = arith.mulf %39, %38 : vector<16x128xf32>
    %cst_25 = arith.constant dense<0.000000e+00> : vector<16x128xf32>
    %41 = tpu.matmul %31, %5, %cst_25 {dimension_numbers = #tpu.dot_dimension_numbers<[1], [0], [0], [1], [0, 0, 1, 1], [], []>} : vector<16x16xf32>, vector<16x128xf32>, vector<16x128xf32> -> vector<16x128xf32>
    %42 = arith.addf %40, %41 : vector<16x128xf32>
    %c0_26 = arith.constant 0 : index
    %c0_27 = arith.constant 0 : index
    %43 = vector.load %arg12[%c0_26, %c0_27] : memref<16x128xf32, #tpu.memory_space<vmem>>, vector<16x128xf32>
    tpu.vector_store %arg12[%c0_26, %c0_27], %42 {strides = array<i32>} : memref<16x128xf32, #tpu.memory_space<vmem>>, vector<16x128xf32>,
    %c0_28 = arith.constant 0 : index
    %c0_29 = arith.constant 0 : index
    %44 = vector.load %arg10[%c0_28, %c0_29] : memref<16x1xf32, #tpu.memory_space<vmem>>, vector<16x1xf32>
    tpu.vector_store %arg10[%c0_28, %c0_29], %25 {strides = array<i32>} : memref<16x1xf32, #tpu.memory_space<vmem>>, vector<16x1xf32>,
    %c0_i32_30 = arith.constant 0 : i32
    %45 = arith.cmpi eq, %arg1, %c0_i32_30 : i32
    %46 = arith.extui %45 : i1 to i32
    %c0_i32_31 = arith.constant 0 : i32
    %47 = arith.cmpi ne, %46, %c0_i32_31 : i32
    scf.if %47 {
      %c0_32 = arith.constant 0 : index
      %c0_33 = arith.constant 0 : index
      %48 = vector.load %arg11[%c0_32, %c0_33] : memref<16x1xf32, #tpu.memory_space<vmem>>, vector<16x1xf32>
      %cst_34 = arith.constant 9.99999968E-21 : f32
      %49 = vector.broadcast %cst_34 : f32 to vector<16x1xf32>
      %50 = arith.maximumf %48, %49 : vector<16x1xf32>
      %51 = tpu.reciprocal %50 {approx = true} : vector<16x1xf32> -> vector<16x1xf32>
      %c0_35 = arith.constant 0 : index
      %c0_36 = arith.constant 0 : index
      %52 = vector.load %arg12[%c0_35, %c0_36] : memref<16x128xf32, #tpu.memory_space<vmem>>, vector<16x128xf32>
      %53 = vector.broadcast %51 : vector<16x1xf32> to vector<16x128xf32>
      %54 = arith.mulf %52, %53 : vector<16x128xf32>
      %c0_37 = arith.constant 0 : index
      %c0_38 = arith.constant 0 : index
      %55 = vector.load %arg8[%c0_37, %c0_38] : memref<16x128xf32, #tpu.memory_space<vmem>>, vector<16x128xf32>
      tpu.vector_store %arg8[%c0_37, %c0_38], %54 {strides = array<i32>} : memref<16x128xf32, #tpu.memory_space<vmem>>, vector<16x128xf32>,
    } else {
    }
    return
  }
  func.func @transform_0(%arg0: i32, %arg1: i32) -> (i32, i32) {
    %c0_i32 = arith.constant 0 : i32
    %c0_i32_0 = arith.constant 0 : i32
    return %arg0, %c0_i32 : i32, i32
  }
  func.func @transform_1(%arg0: i32, %arg1: i32) -> (i32, i32) {
    %c0_i32 = arith.constant 0 : i32
    %c0_i32_0 = arith.constant 0 : i32
    return %arg1, %c0_i32 : i32, i32
  }
  func.func @transform_2(%arg0: i32, %arg1: i32) -> (i32, i32) {
    %c0_i32 = arith.constant 0 : i32
    %c0_i32_0 = arith.constant 0 : i32
    %c0_i32_1 = arith.constant 0 : i32
    return %c0_i32, %c0_i32_0 : i32, i32
  }
  func.func @transform_3(%arg0: i32, %arg1: i32) -> (i32, i32) {
    %c0_i32 = arith.constant 0 : i32
    %c0_i32_0 = arith.constant 0 : i32
    %c0_i32_1 = arith.constant 0 : i32
    return %c0_i32, %c0_i32_0 : i32, i32
  }
  func.func @transform_4(%arg0: i32, %arg1: i32) -> (i32, i32) {
    %c0_i32 = arith.constant 0 : i32
    %c0_i32_0 = arith.constant 0 : i32
    %c0_i32_1 = arith.constant 0 : i32
    return %c0_i32, %c0_i32_0 : i32, i32
  }
  func.func @transform_5(%arg0: i32, %arg1: i32) -> (i32, i32) {
    %c0_i32 = arith.constant 0 : i32
    return %arg0, %arg1 : i32, i32
  }
  func.func @transform_6(%arg0: i32, %arg1: i32) -> (i32, i32) {
    %c0_i32 = arith.constant 0 : i32
    %c0_i32_0 = arith.constant 0 : i32
    return %arg0, %c0_i32 : i32, i32
  }
}

</mosaic_0001>

<llo_original>
// kernel: tpu_custom_call.1
$region0: #{tpu_custom_call.1}
  #allocation0 [shape = 'u32[]', space=smem, size = 0x4, offset = 0x4, fixed_abs, tag = 'smem constant byte address 0x4 - core index']
  #allocation1 [shape = 'u32[144,128]{1,0:T(1,128)}', space=vmem, size = 0x12000, scoped, tag = 'internal scratch']
  #allocation2 [shape = 'f32[16,1]{1,0:T(8,128)}', space=vmem, size = 0x2000, scoped, tag = 'scratch operand']
  #allocation3 [shape = 'f32[16,1]{1,0:T(8,128)}', space=vmem, size = 0x2000, scoped, tag = 'scratch operand']
  #allocation4 [shape = 'f32[16,1]{1,0:T(8,128)}', space=vmem, size = 0x2000, scoped, tag = 'scratch operand']
  #allocation5 [shape = 'f32[16,128]{1,0:T(8,128)}', space=vmem, size = 0x2000, scoped, tag = 'scratch operand']
  %s0 = inlined_call_operand.hbm [shape: f32[16,16], index: 0, kind: input, shape index: {}]
  %s1 = inlined_call_operand.hbm [shape: f32[16,16], index: 1, kind: input, shape index: {}]
  %s2 = inlined_call_operand.hbm [shape: f32[16,128], index: 2, kind: input, shape index: {}]
  %s3 = inlined_call_operand.vmem [shape: f32[1,128], index: 3, kind: input, shape index: {}]
  %s4 = inlined_call_operand.vmem [shape: f32[1,128], index: 4, kind: input, shape index: {}]
  %s5 = inlined_call_operand.hbm [shape: f32[16,16], index: 5, kind: input, shape index: {}]
  %s6 = inlined_call_operand.hbm [shape: f32[16,128], index: 6, kind: output, shape index: {}]
  %s7 = sld [smem:[#allocation0]]
  $region58: #{tpu_custom_call.1} parent=0
    _
  %s9 = ssub.s32 1, %s7
  %s10 = scalar_select 0, %s9, %s7
  $region1: #{tpu_custom_call.1} parent=0
    #allocation6 [shape = 'u8[8192]{0}', space=vmem, size = 0x2000, scoped, tag = 'input window, operand 0, single buffered']
    #allocation7 [shape = 's32[1]{0}', space=sflag, size = 0x4, scoped, tag = 'scoped memory for tpu_custom_call.1']
    #allocation8 [shape = 's32[1]{0}', space=sflag, size = 0x4, scoped, tag = 'scoped memory for tpu_custom_call.1']
    #allocation9 [shape = 'u8[8192]{0}', space=vmem, size = 0x2000, scoped, tag = 'input window, operand 1, single buffered']
    #allocation10 [shape = 's32[1]{0}', space=sflag, size = 0x4, scoped, tag = 'scoped memory for tpu_custom_call.1']
    #allocation11 [shape = 'u8[8192]{0}', space=vmem, size = 0x2000, scoped, tag = 'input window, operand 2, single buffered']
    #allocation12 [shape = 'u8[8192]{0}', space=vmem, size = 0x2000, scoped, tag = 'input window, operand 5, single buffered']
    #allocation13 [shape = 's32[1]{0}', space=sflag, size = 0x4, scoped, tag = 'scoped memory for tpu_custom_call.1']
    #allocation14 [shape = 'u8[8192]{0}', space=vmem, size = 0x2000, scoped, tag = 'output window, operand 0, single buffered']
    %11 = vsyncpa [#allocation7], 0
    %12 = vsyncpa [#allocation10], 0
    %13 = vsyncpa [#allocation13], 0
    %14 = vsyncpa [#allocation8], 0
    // Predicated region
    $region2: #{tpu_custom_call.1} parent=1 // pred_check
      _
    $region3: #{tpu_custom_call.1} parent=1 // pred_check_branch
      %16 = sbr.rel (0) target = $region5
    $region4: #{tpu_custom_call.1} parent=1 // pred_region
      %s18 = ssub.s32 256, 256
      %19 = vsyncadd [#allocation7], %s18
      %s20 = sshll.u32 [#allocation6], 4
      %s21 = int_to_ptr.vmem [resolvable:$true] %s20
      %26 = dma.hbm_to_vmem [thread:$0]  %s0, 256, %s21, [#allocation7], 128, 128, 8
    $region5: #{tpu_custom_call.1} parent=1 // pred_fallthru
      _
    // Predicated region
    $region6: #{tpu_custom_call.1} parent=1 // pred_check
      _
    $region7: #{tpu_custom_call.1} parent=1 // pred_check_branch
      %28 = sbr.rel (0) target = $region9
    $region8: #{tpu_custom_call.1} parent=1 // pred_region
      %s30 = ssub.s32 256, 256
      %31 = vsyncadd [#allocation10], %s30
      %s32 = sshll.u32 [#allocation9], 4
      %s33 = int_to_ptr.vmem [resolvable:$true] %s32
      %38 = dma.hbm_to_vmem [thread:$0]  %s1, 256, %s33, [#allocation10], 128, 128, 8
    $region9: #{tpu_custom_call.1} parent=1 // pred_fallthru
      _
    // Predicated region
    $region10: #{tpu_custom_call.1} parent=1 // pred_check
      _
    $region11: #{tpu_custom_call.1} parent=1 // pred_check_branch
      %40 = sbr.rel (0) target = $region13
    $region12: #{tpu_custom_call.1} parent=1 // pred_region
      %s42 = ssub.s32 256, 256
      %43 = vsyncadd [#allocation10], %s42
      %s44 = sshll.u32 [#allocation11], 4
      %s45 = int_to_ptr.vmem [resolvable:$true] %s44
      %50 = dma.hbm_to_vmem [thread:$0]  %s2, 256, %s45, [#allocation10], 128, 128, 8
    $region13: #{tpu_custom_call.1} parent=1 // pred_fallthru
      _
    // Predicated region
    $region14: #{tpu_custom_call.1} parent=1 // pred_check
      _
    $region15: #{tpu_custom_call.1} parent=1 // pred_check_branch
      %52 = sbr.rel (0) target = $region17
    $region16: #{tpu_custom_call.1} parent=1 // pred_region
      _
    $region17: #{tpu_custom_call.1} parent=1 // pred_fallthru
      _
    // Predicated region
    $region18: #{tpu_custom_call.1} parent=1 // pred_check
      _
    $region19: #{tpu_custom_call.1} parent=1 // pred_check_branch
      %54 = sbr.rel (0) target = $region21
    $region20: #{tpu_custom_call.1} parent=1 // pred_region
      _
    $region21: #{tpu_custom_call.1} parent=1 // pred_fallthru
      _
    // Predicated region
    $region22: #{tpu_custom_call.1} parent=1 // pred_check
      _
    $region23: #{tpu_custom_call.1} parent=1 // pred_check_branch
      %56 = sbr.rel (0) target = $region25
    $region24: #{tpu_custom_call.1} parent=1 // pred_region
      %s58 = ssub.s32 256, 256
      %59 = vsyncadd [#allocation13], %s58
      %s60 = sshll.u32 [#allocation12], 4
      %s61 = int_to_ptr.vmem [resolvable:$true] %s60
      %66 = dma.hbm_to_vmem [thread:$0]  %s5, 256, %s61, [#allocation13], 128, 128, 8
    $region25: #{tpu_custom_call.1} parent=1 // pred_fallthru
      _
    // Predicated region
    $region26: #{tpu_custom_call.1} parent=1 // pred_check
      _
    $region27: #{tpu_custom_call.1} parent=1 // pred_check_branch
      %68 = sbr.rel (0) target = $region29
    $region28: #{tpu_custom_call.1} parent=1 // pred_region
      %69 = dma.done [#allocation7], 256
    $region29: #{tpu_custom_call.1} parent=1 // pred_fallthru
      _
    // Predicated region
    $region30: #{tpu_custom_call.1} parent=1 // pred_check
      _
    $region31: #{tpu_custom_call.1} parent=1 // pred_check_branch
      %71 = sbr.rel (0) target = $region33
    $region32: #{tpu_custom_call.1} parent=1 // pred_region
      %72 = dma.done [#allocation10], 256
    $region33: #{tpu_custom_call.1} parent=1 // pred_fallthru
      _
    // Predicated region
    $region34: #{tpu_custom_call.1} parent=1 // pred_check
      _
    $region35: #{tpu_custom_call.1} parent=1 // pred_check_branch
      %74 = sbr.rel (0) target = $region37
    $region36: #{tpu_custom_call.1} parent=1 // pred_region
      %75 = dma.done [#allocation10], 256
    $region37: #{tpu_custom_call.1} parent=1 // pred_fallthru
      _
    // Predicated region
    $region38: #{tpu_custom_call.1} parent=1 // pred_check
      _
    $region39: #{tpu_custom_call.1} parent=1 // pred_check_branch
      %77 = sbr.rel (0) target = $region41
    $region40: #{tpu_custom_call.1} parent=1 // pred_region
      %78 = dma.done [#allocation13], 256
    $region41: #{tpu_custom_call.1} parent=1 // pred_fallthru
      _
    %p79 = scmp.eq.s32.totalorder 0, 0
    // Predicated region
    $region42: #{tpu_custom_call.1} parent=1 // pred_check
      %p80 = pneg %p79
    $region43: #{tpu_custom_call.1} parent=1 // pred_check_branch
      %82 = sbr.rel (%p80) target = $region45
    $region44: #{tpu_custom_call.1} parent=1 // pred_region
      %v83 = vld [vmem:[#allocation6] sm:$0xff]
      %v84 = vld [vmem:[#allocation6 + $0x8] sm:$0xff]
      %v85 = vld [vmem:[#allocation11] sm:$0xff]
      %v86 = vld [vmem:[#allocation11 + $0x8] sm:$0xff]
      %vm87 = vcmask 130048
      %v89 = vsel %vm87, %v83, 0
      %v92 = vsel %vm87, %v84, 0
      %94 = vmatprep.subr.mxu0 0.0
      %95 = vmatpush1.msra.mxu0 0.0
      %96 = vmatprep.subr.mxu0 0.0
      %97 = vmatpush1.msra.mxu0 0.0
      %98 = vmatprep.subr.mxu0 0.0
      %99 = vmatpush1.msra.mxu0 0.0
      %100 = vmatprep.subr.mxu0 0.0
      %101 = vmatpush1.msra.mxu0 0.0
      %102 = vmatprep.subr.mxu0 0.0
      %103 = vmatpush1.msra.mxu0 0.0
      %104 = vmatprep.subr.mxu0 0.0
      %105 = vmatpush1.msra.mxu0 0.0
      %106 = vmatprep.subr.mxu0 0.0
      %107 = vmatpush1.msra.mxu0 0.0
      %108 = vmatprep.subr.mxu0 0.0
      %109 = vmatpush1.msra.mxu0 0.0
      %110 = vmatprep.subr.mxu0 0.0
      %111 = vmatpush1.msra.mxu0 0.0
      %112 = vmatprep.subr.mxu0 0.0
      %113 = vmatpush1.msra.mxu0 0.0
      %114 = vmatprep.subr.mxu0 0.0
      %115 = vmatpush1.msra.mxu0 0.0
      %116 = vmatprep.subr.mxu0 0.0
      %117 = vmatpush1.msra.mxu0 0.0
      %118 = vmatprep.subr.mxu0 0.0
      %119 = vmatpush1.msra.mxu0 0.0
      %120 = vmatprep.subr.mxu0 0.0
      %121 = vmatpush1.msra.mxu0 0.0
      %122 = vmatprep.subr.mxu0 0.0
      %123 = vmatpush1.msra.mxu0 %v86
      %124 = vmatprep.subr.mxu0 0.0
      %125 = vmatpush1.msra.mxu0 %v85
      %126 = vmatprep.subr.mxu0 0.0
      %127 = vmatpush2.msra.mxu0 0.0
      %128 = vmatprep.subr.mxu0 0.0
      %129 = vmatpush2.msra.mxu0 0.0
      %130 = vmatprep.subr.mxu0 0.0
      %131 = vmatpush2.msra.mxu0 0.0
      %132 = vmatprep.subr.mxu0 0.0
      %133 = vmatpush2.msra.mxu0 0.0
      %134 = vmatprep.subr.mxu0 0.0
      %135 = vmatpush2.msra.mxu0 0.0
      %136 = vmatprep.subr.mxu0 0.0
      %137 = vmatpush2.msra.mxu0 0.0
      %138 = vmatprep.subr.mxu0 0.0
      %139 = vmatpush2.msra.mxu0 0.0
      %140 = vmatprep.subr.mxu0 0.0
      %141 = vmatpush2.msra.mxu0 0.0
      %142 = vmatprep.subr.mxu0 0.0
      %143 = vmatpush2.msra.mxu0 0.0
      %144 = vmatprep.subr.mxu0 0.0
      %145 = vmatpush2.msra.mxu0 0.0
      %146 = vmatprep.subr.mxu0 0.0
      %147 = vmatpush2.msra.mxu0 0.0
      %148 = vmatprep.subr.mxu0 0.0
      %149 = vmatpush2.msra.mxu0 0.0
      %150 = vmatprep.subr.mxu0 0.0
      %151 = vmatpush2.msra.mxu0 0.0
      %152 = vmatprep.subr.mxu0 0.0
      %153 = vmatpush2.msra.mxu0 0.0
      %154 = vmatprep.subr.mxu0 0.0
      %155 = vmatpush2.msra.mxu0 0.0
      %156 = vmatprep.subr.mxu0 0.0
      %157 = vmatpush2.msra.mxu0 0.0
      %158 = vmatprep.mubr.f32.mxu0 0.0
      %159 = vmatmul.mubr.f32.gmra.mxu0 %v89
      %v160 = vpop.f32.mrf.mxu0
      %v161 = vadd.f32 0.0, %v160
      %v162 = vpop.f32.mrf.mxu0
      %163 = vmatprep.mubr.f32.mxu0 0.0
      %164 = vmatmul.mubr.f32.gmra.mxu0 %v92
      %v165 = vpop.f32.mrf.mxu0
      %v166 = vadd.f32 0.0, %v165
      %v167 = vpop.f32.mrf.mxu0
      %168 = vdwg.mxu0
      %v169 = vld [vmem:[%s4] sm:$0x1]
      %v171 = vlaneseq
      %v172 = vshrl.u32 %v171, 7
      %v173 = vsub.s32 0, %v172
      %v174 = vrot.slane %v169, %v173
      %v176 = vmul.f32 %v161, %v174
      %v177 = vmul.f32 %v166, %v174
      %178 = vadd.xlane.f32.xlu0 %v176
      %v179 = vpop.xlane.xlu0 %178
      %180 = vadd.xlane.f32.xlu0 %v177
      %v181 = vpop.xlane.xlu0 %180
      %vm182 = vcmask 7168
      %183 = vst.msk [vmem:[#allocation2] sm:$0xff] %vm182, %v179
      %184 = vst.msk [vmem:[#allocation2 + $0x8] sm:$0xff] %vm182, %v181
      %185 = vst.msk [vmem:[#allocation3] sm:$0xff] %vm182, -1e+30
      %186 = vst.msk [vmem:[#allocation3 + $0x8] sm:$0xff] %vm182, -1e+30
      %187 = vst.msk [vmem:[#allocation4] sm:$0xff] %vm182, 0.0
      %188 = vst.msk [vmem:[#allocation4 + $0x8] sm:$0xff] %vm182, 0.0
      %189 = vst [vmem:[#allocation5] sm:$0xff] 0.0
      %190 = vst [vmem:[#allocation5 + $0x8] sm:$0xff] 0.0
    $region45: #{tpu_custom_call.1} parent=1 // pred_fallthru
      _
    %v191 = vld [vmem:[#allocation9] sm:$0xff]
    %v192 = vld [vmem:[#allocation9 + $0x8] sm:$0xff]
    %v193 = vld [vmem:[#allocation11] sm:$0xff]
    %v194 = vld [vmem:[#allocation11 + $0x8] sm:$0xff]
    %vm195 = vcmask 130048
    %v197 = vsel %vm195, %v191, 0
    %v200 = vsel %vm195, %v192, 0
    %202 = vmatprep.subr.mxu0 0.0
    %203 = vmatpush1.msra.mxu0 0.0
    %204 = vmatprep.subr.mxu0 0.0
    %205 = vmatpush1.msra.mxu0 0.0
    %206 = vmatprep.subr.mxu0 0.0
    %207 = vmatpush1.msra.mxu0 0.0
    %208 = vmatprep.subr.mxu0 0.0
    %209 = vmatpush1.msra.mxu0 0.0
    %210 = vmatprep.subr.mxu0 0.0
    %211 = vmatpush1.msra.mxu0 0.0
    %212 = vmatprep.subr.mxu0 0.0
    %213 = vmatpush1.msra.mxu0 0.0
    %214 = vmatprep.subr.mxu0 0.0
    %215 = vmatpush1.msra.mxu0 0.0
    %216 = vmatprep.subr.mxu0 0.0
    %217 = vmatpush1.msra.mxu0 0.0
    %218 = vmatprep.subr.mxu0 0.0
    %219 = vmatpush1.msra.mxu0 0.0
    %220 = vmatprep.subr.mxu0 0.0
    %221 = vmatpush1.msra.mxu0 0.0
    %222 = vmatprep.subr.mxu0 0.0
    %223 = vmatpush1.msra.mxu0 0.0
    %224 = vmatprep.subr.mxu0 0.0
    %225 = vmatpush1.msra.mxu0 0.0
    %226 = vmatprep.subr.mxu0 0.0
    %227 = vmatpush1.msra.mxu0 0.0
    %228 = vmatprep.subr.mxu0 0.0
    %229 = vmatpush1.msra.mxu0 0.0
    %230 = vmatprep.subr.mxu0 0.0
    %231 = vmatpush1.msra.mxu0 %v194
    %232 = vmatprep.subr.mxu0 0.0
    %233 = vmatpush1.msra.mxu0 %v193
    %234 = vmatprep.subr.mxu0 0.0
    %235 = vmatpush2.msra.mxu0 0.0
    %236 = vmatprep.subr.mxu0 0.0
    %237 = vmatpush2.msra.mxu0 0.0
    %238 = vmatprep.subr.mxu0 0.0
    %239 = vmatpush2.msra.mxu0 0.0
    %240 = vmatprep.subr.mxu0 0.0
    %241 = vmatpush2.msra.mxu0 0.0
    %242 = vmatprep.subr.mxu0 0.0
    %243 = vmatpush2.msra.mxu0 0.0
    %244 = vmatprep.subr.mxu0 0.0
    %245 = vmatpush2.msra.mxu0 0.0
    %246 = vmatprep.subr.mxu0 0.0
    %247 = vmatpush2.msra.mxu0 0.0
    %248 = vmatprep.subr.mxu0 0.0
    %249 = vmatpush2.msra.mxu0 0.0
    %250 = vmatprep.subr.mxu0 0.0
    %251 = vmatpush2.msra.mxu0 0.0
    %252 = vmatprep.subr.mxu0 0.0
    %253 = vmatpush2.msra.mxu0 0.0
    %254 = vmatprep.subr.mxu0 0.0
    %255 = vmatpush2.msra.mxu0 0.0
    %256 = vmatprep.subr.mxu0 0.0
    %257 = vmatpush2.msra.mxu0 0.0
    %258 = vmatprep.subr.mxu0 0.0
    %259 = vmatpush2.msra.mxu0 0.0
    %260 = vmatprep.subr.mxu0 0.0
    %261 = vmatpush2.msra.mxu0 0.0
    %262 = vmatprep.subr.mxu0 0.0
    %263 = vmatpush2.msra.mxu0 0.0
    %264 = vmatprep.subr.mxu0 0.0
    %265 = vmatpush2.msra.mxu0 0.0
    %266 = vmatprep.mubr.f32.mxu0 0.0
    %267 = vmatmul.mubr.f32.gmra.mxu0 %v197
    %v268 = vpop.f32.mrf.mxu0
    %v269 = vadd.f32 0.0, %v268
    %v270 = vpop.f32.mrf.mxu0
    %271 = vmatprep.mubr.f32.mxu0 0.0
    %272 = vmatmul.mubr.f32.gmra.mxu0 %v200
    %v273 = vpop.f32.mrf.mxu0
    %v274 = vadd.f32 0.0, %v273
    %v275 = vpop.f32.mrf.mxu0
    %276 = vdwg.mxu0
    %v277 = vld [vmem:[%s3] sm:$0x1]
    %278 = vmatprep.subr.mxu0 0.0
    %279 = vmatpush1.xpose.msra.mxu0 0.0
    %280 = vmatprep.subr.mxu0 0.0
    %281 = vmatpush1.xpose.msra.mxu0 0.0
    %282 = vmatprep.subr.mxu0 0.0
    %283 = vmatpush1.xpose.msra.mxu0 0.0
    %284 = vmatprep.subr.mxu0 0.0
    %285 = vmatpush1.xpose.msra.mxu0 0.0
    %286 = vmatprep.subr.mxu0 0.0
    %287 = vmatpush1.xpose.msra.mxu0 0.0
    %288 = vmatprep.subr.mxu0 0.0
    %289 = vmatpush1.xpose.msra.mxu0 0.0
    %290 = vmatprep.subr.mxu0 0.0
    %291 = vmatpush1.xpose.msra.mxu0 0.0
    %292 = vmatprep.subr.mxu0 0.0
    %293 = vmatpush1.xpose.msra.mxu0 0.0
    %294 = vmatprep.subr.mxu0 0.0
    %295 = vmatpush1.xpose.msra.mxu0 0.0
    %296 = vmatprep.subr.mxu0 0.0
    %297 = vmatpush1.xpose.msra.mxu0 0.0
    %298 = vmatprep.subr.mxu0 0.0
    %299 = vmatpush1.xpose.msra.mxu0 0.0
    %300 = vmatprep.subr.mxu0 0.0
    %301 = vmatpush1.xpose.msra.mxu0 0.0
    %302 = vmatprep.subr.mxu0 0.0
    %303 = vmatpush1.xpose.msra.mxu0 0.0
    %304 = vmatprep.subr.mxu0 0.0
    %305 = vmatpush1.xpose.msra.mxu0 0.0
    %306 = vmatprep.subr.mxu0 0.0
    %307 = vmatpush1.xpose.msra.mxu0 %v274
    %308 = vmatprep.subr.mxu0 0.0
    %309 = vmatpush1.xpose.msra.mxu0 %v269
    %310 = vmatprep.subr.mxu0 0.0
    %311 = vmatpush2.xpose.msra.mxu0 0.0
    %312 = vmatprep.subr.mxu0 0.0
    %313 = vmatpush2.xpose.msra.mxu0 0.0
    %314 = vmatprep.subr.mxu0 0.0
    %315 = vmatpush2.xpose.msra.mxu0 0.0
    %316 = vmatprep.subr.mxu0 0.0
    %317 = vmatpush2.xpose.msra.mxu0 0.0
    %318 = vmatprep.subr.mxu0 0.0
    %319 = vmatpush2.xpose.msra.mxu0 0.0
    %320 = vmatprep.subr.mxu0 0.0
    %321 = vmatpush2.xpose.msra.mxu0 0.0
    %322 = vmatprep.subr.mxu0 0.0
    %323 = vmatpush2.xpose.msra.mxu0 0.0
    %324 = vmatprep.subr.mxu0 0.0
    %325 = vmatpush2.xpose.msra.mxu0 0.0
    %326 = vmatprep.subr.mxu0 0.0
    %327 = vmatpush2.xpose.msra.mxu0 0.0
    %328 = vmatprep.subr.mxu0 0.0
    %329 = vmatpush2.xpose.msra.mxu0 0.0
    %330 = vmatprep.subr.mxu0 0.0
    %331 = vmatpush2.xpose.msra.mxu0 0.0
    %332 = vmatprep.subr.mxu0 0.0
    %333 = vmatpush2.xpose.msra.mxu0 0.0
    %334 = vmatprep.subr.mxu0 0.0
    %335 = vmatpush2.xpose.msra.mxu0 0.0
    %336 = vmatprep.subr.mxu0 0.0
    %337 = vmatpush2.xpose.msra.mxu0 0.0
    %338 = vmatprep.subr.mxu0 0.0
    %339 = vmatpush2.xpose.msra.mxu0 0.0
    %340 = vmatprep.subr.mxu0 0.0
    %341 = vmatpush2.xpose.msra.mxu0 0.0
    %342 = vmatprep.mubr.f32.mxu0 0.0
    %343 = vmatmul.mubr.f32.gmra.mxu0 %v277
    %v344 = vpop.f32.mrf.mxu0
    %v345 = vadd.f32 0.0, %v344
    %v346 = vpop.f32.mrf.mxu0
    %347 = vdwg.mxu0
    %v348 = vld [vmem:[#allocation2] sm:$0xff]
    %v349 = vld [vmem:[#allocation2 + $0x8] sm:$0xff]
    %351 = vset.pattern.permute.xlu0 0
    %352 = vperm.xlu0 %351, %v348
    %v353 = vpop.permute.xlu0 %352
    %356 = vset.pattern.permute.xlu0 0
    %357 = vperm.xlu0 %356, %v349
    %v358 = vpop.permute.xlu0 %357
    %v360 = vlaneseq
    %v361 = vshrl.u32 %v360, 7
    %v362 = vsub.s32 0, %v361
    %v363 = vrot.slane %v345, %v362
    %v364 = vadd.f32 %v353, %v363
    %v365 = vadd.f32 %v358, %v363
    %vm366 = vcmp.gt.f32.partialorder %v364, 0.0
    %vm367 = vcmp.gt.f32.partialorder %v365, 0.0
    %v368 = vmul.f32 %v364, 0.01
    %v369 = vmul.f32 %v365, 0.01
    %v370 = vsel %vm366, %v364, %v368
    %v371 = vsel %vm367, %v365, %v369
    %v372 = vld [vmem:[#allocation12] sm:$0xff]
    %v373 = vld [vmem:[#allocation12 + $0x8] sm:$0xff]
    %vm374 = vcmp.gt.f32.partialorder %v372, 0.0
    %vm375 = vcmp.gt.f32.partialorder %v373, 0.0
    %v376 = vsel %vm374, %v370, -1e+30
    %v377 = vsel %vm375, %v371, -1e+30
    %v378 = vld [vmem:[#allocation3] sm:$0xff]
    %v379 = vld [vmem:[#allocation3 + $0x8] sm:$0xff]
    %v380 = vsel %vm195, %v376, -inf
    %381 = vmax.xlane.f32.xlu0 %v380
    %v382 = vpop.xlane.xlu0 %381
    %v383 = vsel %vm195, %v377, -inf
    %384 = vmax.xlane.f32.xlu0 %v383
    %v385 = vpop.xlane.xlu0 %384
    %v386 = vmax.f32 %v378, %v382
    %v387 = vmax.f32 %v379, %v385
    %v388 = vsub.f32 %v378, %v386
    %v389 = vsub.f32 %v379, %v387
    %v390 = vmul.f32 %v388, 1.442695
    %v391 = vpow.pop %v390
    %v392 = vmul.f32 %v389, 1.442695
    %v393 = vpow.pop %v392
    %395 = vset.pattern.permute.xlu0 0
    %396 = vperm.xlu0 %395, %v386
    %v397 = vpop.permute.xlu0 %396
    %400 = vset.pattern.permute.xlu0 0
    %401 = vperm.xlu0 %400, %v387
    %v402 = vpop.permute.xlu0 %401
    %v404 = vsub.f32 %v376, %v397
    %v405 = vsub.f32 %v377, %v402
    %v406 = vmul.f32 %v404, 1.442695
    %v407 = vpow.pop %v406
    %v408 = vmul.f32 %v405, 1.442695
    %v409 = vpow.pop %v408
    %v410 = vmul.f32 %v407, %v372
    %v411 = vmul.f32 %v409, %v373
    %v412 = vld [vmem:[#allocation4] sm:$0xff]
    %v413 = vld [vmem:[#allocation4 + $0x8] sm:$0xff]
    %v414 = vmul.f32 %v391, %v412
    %v415 = vmul.f32 %v393, %v413
    %v416 = vsel %vm195, %v410, 0.0
    %417 = vadd.xlane.f32.xlu0 %v416
    %v418 = vpop.xlane.xlu0 %417
    %v419 = vsel %vm195, %v411, 0.0
    %420 = vadd.xlane.f32.xlu0 %v419
    %v421 = vpop.xlane.xlu0 %420
    %v422 = vadd.f32 %v414, %v418
    %v423 = vadd.f32 %v415, %v421
    %vm424 = vcmask 7168
    %425 = vst.msk [vmem:[#allocation4] sm:$0xff] %vm424, %v422
    %426 = vst.msk [vmem:[#allocation4 + $0x8] sm:$0xff] %vm424, %v423
    %v427 = vld [vmem:[#allocation5] sm:$0xff]
    %v428 = vld [vmem:[#allocation5 + $0x8] sm:$0xff]
    %430 = vset.pattern.permute.xlu0 0
    %431 = vperm.xlu0 %430, %v391
    %v432 = vpop.permute.xlu0 %431
    %435 = vset.pattern.permute.xlu0 0
    %436 = vperm.xlu0 %435, %v393
    %v437 = vpop.permute.xlu0 %436
    %v439 = vmul.f32 %v432, %v427
    %v440 = vmul.f32 %v437, %v428
    %v442 = vsel %vm195, %v410, 0
    %v445 = vsel %vm195, %v411, 0
    %447 = vmatprep.subr.mxu0 0.0
    %448 = vmatpush1.msra.mxu0 0.0
    %449 = vmatprep.subr.mxu0 0.0
    %450 = vmatpush1.msra.mxu0 0.0
    %451 = vmatprep.subr.mxu0 0.0
    %452 = vmatpush1.msra.mxu0 0.0
    %453 = vmatprep.subr.mxu0 0.0
    %454 = vmatpush1.msra.mxu0 0.0
    %455 = vmatprep.subr.mxu0 0.0
    %456 = vmatpush1.msra.mxu0 0.0
    %457 = vmatprep.subr.mxu0 0.0
    %458 = vmatpush1.msra.mxu0 0.0
    %459 = vmatprep.subr.mxu0 0.0
    %460 = vmatpush1.msra.mxu0 0.0
    %461 = vmatprep.subr.mxu0 0.0
    %462 = vmatpush1.msra.mxu0 0.0
    %463 = vmatprep.subr.mxu0 0.0
    %464 = vmatpush1.msra.mxu0 0.0
    %465 = vmatprep.subr.mxu0 0.0
    %466 = vmatpush1.msra.mxu0 0.0
    %467 = vmatprep.subr.mxu0 0.0
    %468 = vmatpush1.msra.mxu0 0.0
    %469 = vmatprep.subr.mxu0 0.0
    %470 = vmatpush1.msra.mxu0 0.0
    %471 = vmatprep.subr.mxu0 0.0
    %472 = vmatpush1.msra.mxu0 0.0
    %473 = vmatprep.subr.mxu0 0.0
    %474 = vmatpush1.msra.mxu0 0.0
    %475 = vmatprep.subr.mxu0 0.0
    %476 = vmatpush1.msra.mxu0 %v274
    %477 = vmatprep.subr.mxu0 0.0
    %478 = vmatpush1.msra.mxu0 %v269
    %479 = vmatprep.subr.mxu0 0.0
    %480 = vmatpush2.msra.mxu0 0.0
    %481 = vmatprep.subr.mxu0 0.0
    %482 = vmatpush2.msra.mxu0 0.0
    %483 = vmatprep.subr.mxu0 0.0
    %484 = vmatpush2.msra.mxu0 0.0
    %485 = vmatprep.subr.mxu0 0.0
    %486 = vmatpush2.msra.mxu0 0.0
    %487 = vmatprep.subr.mxu0 0.0
    %488 = vmatpush2.msra.mxu0 0.0
    %489 = vmatprep.subr.mxu0 0.0
    %490 = vmatpush2.msra.mxu0 0.0
    %491 = vmatprep.subr.mxu0 0.0
    %492 = vmatpush2.msra.mxu0 0.0
    %493 = vmatprep.subr.mxu0 0.0
    %494 = vmatpush2.msra.mxu0 0.0
    %495 = vmatprep.subr.mxu0 0.0
    %496 = vmatpush2.msra.mxu0 0.0
    %497 = vmatprep.subr.mxu0 0.0
    %498 = vmatpush2.msra.mxu0 0.0
    %499 = vmatprep.subr.mxu0 0.0
    %500 = vmatpush2.msra.mxu0 0.0
    %501 = vmatprep.subr.mxu0 0.0
    %502 = vmatpush2.msra.mxu0 0.0
    %503 = vmatprep.subr.mxu0 0.0
    %504 = vmatpush2.msra.mxu0 0.0
    %505 = vmatprep.subr.mxu0 0.0
    %506 = vmatpush2.msra.mxu0 0.0
    %507 = vmatprep.subr.mxu0 0.0
    %508 = vmatpush2.msra.mxu0 0.0
    %509 = vmatprep.subr.mxu0 0.0
    %510 = vmatpush2.msra.mxu0 0.0
    %511 = vmatprep.mubr.f32.mxu0 0.0
    %512 = vmatmul.mubr.f32.gmra.mxu0 %v442
    %v513 = vpop.f32.mrf.mxu0
    %v514 = vadd.f32 0.0, %v513
    %v515 = vpop.f32.mrf.mxu0
    %516 = vmatprep.mubr.f32.mxu0 0.0
    %517 = vmatmul.mubr.f32.gmra.mxu0 %v445
    %v518 = vpop.f32.mrf.mxu0
    %v519 = vadd.f32 0.0, %v518
    %v520 = vpop.f32.mrf.mxu0
    %521 = vdwg.mxu0
    %v522 = vadd.f32 %v439, %v514
    %v523 = vadd.f32 %v440, %v519
    %524 = vst [vmem:[#allocation5] sm:$0xff] %v522
    %525 = vst [vmem:[#allocation5 + $0x8] sm:$0xff] %v523
    %526 = vst.msk [vmem:[#allocation3] sm:$0xff] %vm424, %v386
    %527 = vst.msk [vmem:[#allocation3 + $0x8] sm:$0xff] %vm424, %v387
    // Predicated region
    $region46: #{tpu_custom_call.1} parent=1 // pred_check
      %p528 = pneg %p79
    $region47: #{tpu_custom_call.1} parent=1 // pred_check_branch
      %530 = sbr.rel (%p528) target = $region49
    $region48: #{tpu_custom_call.1} parent=1 // pred_region
      %v531 = vld [vmem:[#allocation4] sm:$0xff]
      %v532 = vld [vmem:[#allocation4 + $0x8] sm:$0xff]
      %v533 = vmax.f32 %v531, 1e-20
      %v534 = vmax.f32 %v532, 1e-20
      %v535 = vrcp.pop %v533
      %v536 = vrcp.pop %v534
      %v537 = vld [vmem:[#allocation5] sm:$0xff]
      %v538 = vld [vmem:[#allocation5 + $0x8] sm:$0xff]
      %540 = vset.pattern.permute.xlu0 0
      %541 = vperm.xlu0 %540, %v535
      %v542 = vpop.permute.xlu0 %541
      %545 = vset.pattern.permute.xlu0 0
      %546 = vperm.xlu0 %545, %v536
      %v547 = vpop.permute.xlu0 %546
      %v549 = vmul.f32 %v537, %v542
      %v550 = vmul.f32 %v538, %v547
      %551 = vst [vmem:[#allocation14] sm:$0xff] %v549
      %552 = vst [vmem:[#allocation14 + $0x8] sm:$0xff] %v550
    $region49: #{tpu_custom_call.1} parent=1 // pred_fallthru
      _
    // Predicated region
    $region50: #{tpu_custom_call.1} parent=1 // pred_check
      _
    $region51: #{tpu_custom_call.1} parent=1 // pred_check_branch
      %554 = sbr.rel (0) target = $region53
    $region52: #{tpu_custom_call.1} parent=1 // pred_region
      %s556 = ssub.s32 256, 256
      %557 = vsyncadd [#allocation8], %s556
      %s558 = sshll.u32 [#allocation14], 4
      %s559 = int_to_ptr.vmem [resolvable:$true] %s558
      %564 = dma.vmem_to_hbm [thread:$0]  %s559, 256, %s6, [#allocation8], 128, 128, 8
    $region53: #{tpu_custom_call.1} parent=1 // pred_fallthru
      _
    // Predicated region
    $region54: #{tpu_custom_call.1} parent=1 // pred_check
      _
    $region55: #{tpu_custom_call.1} parent=1 // pred_check_branch
      %566 = sbr.rel (0) target = $region57
    $region56: #{tpu_custom_call.1} parent=1 // pred_region
      %567 = dma.done [#allocation8], 256
    $region57: #{tpu_custom_call.1} parent=1 // pred_fallthru
      _
    %568 = vsyncpa [#allocation7], 1
    %569 = vsyncpa [#allocation10], 1
    %570 = vsyncpa [#allocation13], 1
    %571 = vsyncpa [#allocation8], 1

</llo_original>
